<compile_context>
chip_gen: v7x
topology: tpu7x:2x2x1
jax: 0.10.0
libtpu: 0.0.40
codegen_flags: <defaults>
</compile_context>

<pallas_src>
import functools

import jax
import jax.numpy as jnp
from jax.experimental import pallas as pl
from jax.experimental.pallas import tpu as pltpu


def _round_up(x, m):
    return ((x + m - 1) // m) * m


def _vmem_limit_bytes():
    """Per-generation VMEM budget: ~3/4 of physical VMEM.

    128 MiB physical on v5e/v6e -> 96 MiB budget; 64 MiB on v7x -> 48 MiB budget.
    Falls back to the conservative (v7x) number if the query is unavailable."""
    try:
        phys = int(pltpu.get_tpu_info().vmem_capacity_bytes)
    except Exception:
        phys = 64 * 1024 * 1024
    return max(32 * 1024 * 1024, (phys * 3) // 4)


# ---------------------------------------------------------------------------
# Pass 1: fused projection  [z1 | el | er , ft] = x @ W_big + b_big
# ---------------------------------------------------------------------------
def projection_kernel(x_ref, wbig_ref, bbig_ref, z1_ref, ft_ref, *, z1_cols):
    proj = jnp.dot(x_ref[...], wbig_ref[...],
                   preferred_element_type=jnp.float32) + bbig_ref[...]
    z1_ref[...] = proj[:, :z1_cols]                       # z1 with el (col f) / er (col f+1)
    ft_ref[...] = proj[:, z1_cols:].astype(jnp.bfloat16)  # bf16: halves pass-2 HBM/VMEM, MXU 2x


# ---------------------------------------------------------------------------
# Pass 2a (small graphs): plain masked softmax + aggregation, single src pass
# ---------------------------------------------------------------------------
def gat_small_kernel(er_ref, el_ref, z1_ref, ft_ref, adj_ref, bgat_ref, out_ref, *, f_pad):
    # e[d, s] = leaky_relu(el[s] + er[d], 0.2) on edges s->d; off-edges masked.
    # NOTE: the mask sentinel must stay FINITE (-1e30).  With -inf the softmax shift
    # would produce inf - inf = NaN; with -1e30 masked entries underflow to exactly 0.
    e = er_ref[...] + el_ref[...]                 # (TD,1)+(1,NS) -> (TD,NS), pure VPU broadcast
    e = jnp.maximum(e, 0.2 * e)                   # leaky_relu: 2 VALU ops (vs 3 for cmp+select)
    e = jnp.where(adj_ref[...] > 0, e, -1e30)

    m = jnp.max(e, axis=-1, keepdims=True)
    p = jnp.exp(e - m)                            # masked entries -> exactly 0 for real rows
    l = jnp.sum(p, axis=-1, keepdims=True)
    # Padding dst rows (no edges anywhere) produce garbage here; they are removed by the
    # wrapper's final out[:n, :f] slice (real nodes always have a self-loop edge).
    inv = pl.reciprocal(jnp.maximum(l, 1e-20), approx=True)
    h = jnp.dot(p.astype(jnp.bfloat16), ft_ref[...],
                preferred_element_type=jnp.float32) * inv
    h = jnp.maximum(h + bgat_ref[...], 0.0)       # GATConv bias + ReLU
    out_ref[...] = h + z1_ref[:, :f_pad]          # GraphExtractor residual


# ---------------------------------------------------------------------------
# Pass 2b (large graphs): streaming online-softmax + aggregation (flash style)
# ---------------------------------------------------------------------------
def gat_stream_kernel(er_ref, el_ref, z1_ref, ft_ref, adj_ref, bgat_ref,
                      out_ref, m_sc, l_sc, acc_sc, *, f_pad, tile_s, ft_resident):
    j = pl.program_id(1)

    @pl.when(j == 0)
    def _():
        m_sc[...] = jnp.full_like(m_sc, -1e30)    # finite sentinel, NOT -inf (inf-inf = NaN)
        l_sc[...] = jnp.zeros_like(l_sc)
        acc_sc[...] = jnp.zeros_like(acc_sc)

    e = er_ref[...] + el_ref[...]                 # (TD,1)+(1,TS) -> (TD,TS)
    e = jnp.maximum(e, 0.2 * e)                   # leaky_relu
    e = jnp.where(adj_ref[...] > 0, e, -1e30)

    m_prev = m_sc[...]
    m_new = jnp.maximum(m_prev, jnp.max(e, axis=-1, keepdims=True))
    alpha = jnp.exp(m_prev - m_new)               # rescale previously accumulated partials
    p = jnp.exp(e - m_new)
    l_sc[...] = alpha * l_sc[...] + jnp.sum(p, axis=-1, keepdims=True)
    if ft_resident:
        # ft is fully VMEM-resident; slice the current src tile in-kernel (aligned start).
        ft_tile = ft_ref[pl.ds(pl.multiple_of(j * tile_s, tile_s), tile_s), :]
    else:
        ft_tile = ft_ref[...]
    acc_sc[...] = alpha * acc_sc[...] + jnp.dot(
        p.astype(jnp.bfloat16), ft_tile, preferred_element_type=jnp.float32)
    m_sc[...] = m_new

    @pl.when(j == pl.num_programs(1) - 1)
    def _():
        # Rows with no incoming edge at all are only the padding rows (dgl.add_self_loop
        # guarantees a self edge per real node); they stay finite and get sliced off.
        inv = pl.reciprocal(jnp.maximum(l_sc[...], 1e-20), approx=True)
        h = acc_sc[...] * inv
        h = jnp.maximum(h + bgat_ref[...], 0.0)
        out_ref[...] = h + z1_ref[:, :f_pad]


# ---------------------------------------------------------------------------
# Wrapper
# ---------------------------------------------------------------------------
def graph_extractor(x, adj, params, *, tile_d=None, tile_s=None, force_streaming=False):
    """x: (N, obs_dim) f32; adj: (N, N), adj[dst, src] != 0 iff edge src->dst
    (self-loops included, mirroring dgl.add_self_loop).  Returns (N, features_dim) f32.

    tile_d / tile_s optionally override dst / src tile sizes (multiples of 128);
    tile_s is ignored on the small-graph (single-src-pass) path.  force_streaming
    forces the online-softmax streaming path (testing / huge N)."""
    n, obs_dim = x.shape
    f = params["w_enc"].shape[1]

    f_pad = _round_up(f, 128)                  # lane-dense feature block (64 -> 128)
    z1_cols = _round_up(f + 2, 128)            # z1 block also carries el (col f), er (col f+1)
    obs_pad = _round_up(obs_dim, 128)          # lane-dense K dim (44 -> 128)
    c_pad = z1_cols + f_pad                    # fused projection width

    vmem_limit = _vmem_limit_bytes()
    n_pad0 = _round_up(max(n, 128), 128)

    # ---- pass-2 path / tile selection -------------------------------------------------
    # Small-graph path: all src nodes in one tile (plain masked softmax, no online
    # accumulation).  Requires resident ft + a (tile_d x n) adjacency stripe + its f32
    # temporaries to fit in about half the VMEM budget.
    td_guess = 128 if n_pad0 <= 256 else 256   # keep >= 2 dst tiles for v7x's 2 TensorCores
    small_need = (2 * n_pad0 * f_pad * 2       # resident ft (bf16, worst case 2 buffers)
                  + 2 * td_guess * n_pad0      # adjacency stripe (int8, double-buffered)
                  + 4 * td_guess * n_pad0 * 4  # e / p f32 temporaries (conservative)
                  + 4 * td_guess * (z1_cols + f_pad) * 4)   # z1 / out blocks
    use_small = (not force_streaming) and small_need <= vmem_limit // 2

    if use_small:
        tile_d = tile_d or td_guess
        assert tile_d % 128 == 0
        n_pad = _round_up(n_pad0, tile_d)
        tile_s = n_pad                          # single src tile
    else:
        tile_d = tile_d or 256
        tile_s = tile_s or 512                  # long-K contraction, fewer grid steps
        assert tile_d % 128 == 0 and tile_s % 128 == 0
        assert max(tile_d, tile_s) % min(tile_d, tile_s) == 0
        n_pad = _round_up(n_pad0, max(tile_d, tile_s))
    nt_d = n_pad // tile_d
    nt_s = n_pad // tile_s
    # ft resident in pass 2 when it fits comfortably (counting 2 pipeline buffers).
    ft_resident = use_small or (2 * n_pad * f_pad * 2 <= vmem_limit // 3)

    # ---- parameter folding --------------------------------------------------------------
    w_enc = params["w_enc"].astype(jnp.float32)
    b_enc = params["b_enc"].astype(jnp.float32).reshape(1, f)
    w_fc = params["w_fc"].astype(jnp.float32)
    attn_l = params["attn_l"].astype(jnp.float32).reshape(1, f)
    attn_r = params["attn_r"].astype(jnp.float32).reshape(1, f)
    b_gat = params["b_gat"].astype(jnp.float32).reshape(1, f)

    # Fold the chained linears and both attention projections into ONE matmul:
    #   proj = x @ W_big + b_big = [ z1 | el | er | 0... , ft | 0... ]
    w_ef = w_enc @ w_fc                          # x @ w_ef + b_ft = ft
    b_ft = b_enc @ w_fc
    w_big = jnp.zeros((obs_pad, c_pad), jnp.float32)
    w_big = w_big.at[:obs_dim, :f].set(w_enc)
    w_big = w_big.at[:obs_dim, f].set((w_ef @ attn_l.T)[:, 0])
    w_big = w_big.at[:obs_dim, f + 1].set((w_ef @ attn_r.T)[:, 0])
    w_big = w_big.at[:obs_dim, z1_cols:z1_cols + f].set(w_ef)
    b_big = jnp.zeros((1, c_pad), jnp.float32)
    b_big = b_big.at[:, :f].set(b_enc)
    b_big = b_big.at[:, f].set((b_ft @ attn_l.T)[0, 0])
    b_big = b_big.at[:, f + 1].set((b_ft @ attn_r.T)[0, 0])
    b_big = b_big.at[:, z1_cols:z1_cols + f].set(b_ft)
    b_gat_pad = jnp.zeros((1, f_pad), jnp.float32).at[:, :f].set(b_gat)

    x_pad = jnp.zeros((n_pad, obs_pad), jnp.float32).at[:n, :obs_dim].set(
        x.astype(jnp.float32))
    # Adjacency travels as int8: 4x less HBM traffic / VMEM than f32.
    adj_i8 = jnp.zeros((n_pad, n_pad), jnp.int8).at[:n, :n].set(
        (adj != 0).astype(jnp.int8))

    # ---- pass 1: fused lane-dense projection ---------------------------------------------
    z1, ft = pl.pallas_call(
        functools.partial(projection_kernel, z1_cols=z1_cols),
        out_shape=(jax.ShapeDtypeStruct((n_pad, z1_cols), jnp.float32),
                   jax.ShapeDtypeStruct((n_pad, f_pad), jnp.bfloat16)),
        grid_spec=pltpu.PrefetchScalarGridSpec(
            num_scalar_prefetch=0,
            grid=(n_pad // tile_d,),
            in_specs=[pl.BlockSpec((tile_d, obs_pad), lambda i: (i, 0)),
                      pl.BlockSpec((obs_pad, c_pad), lambda i: (0, 0)),
                      pl.BlockSpec((1, c_pad), lambda i: (0, 0))],
            out_specs=[pl.BlockSpec((tile_d, z1_cols), lambda i: (i, 0)),
                       pl.BlockSpec((tile_d, f_pad), lambda i: (i, 0))]),
        compiler_params=pltpu.CompilerParams(
            dimension_semantics=("parallel",),
            vmem_limit_bytes=vmem_limit),
    )(x_pad, w_big, b_big)

    # el / er were produced lane-dense inside the z1 block (cols f, f+1); pull the two
    # O(N) vectors out here (tiny XLA slices) in the layouts pass 2 broadcasts from.
    el_row = z1[:, f].reshape(1, n_pad)        # src scores along lanes
    er_col = z1[:, f + 1].reshape(n_pad, 1)    # dst scores along sublanes

    cost = pl.CostEstimate(
        flops=2 * n_pad * n_pad * f_pad + 12 * n_pad * n_pad,
        transcendentals=n_pad * n_pad,
        bytes_accessed=(n_pad * n_pad                                      # adj (int8)
                        + n_pad * f_pad * 2 * (1 if ft_resident else nt_d)  # ft (bf16)
                        + n_pad * (z1_cols + f_pad) * 4                     # z1 + out (f32)
                        + n_pad * 8))                                       # el / er

    # ---- pass 2: masked softmax + aggregation --------------------------------------------
    if use_small:
        out = pl.pallas_call(
            functools.partial(gat_small_kernel, f_pad=f_pad),
            out_shape=jax.ShapeDtypeStruct((n_pad, f_pad), jnp.float32),
            grid_spec=pltpu.PrefetchScalarGridSpec(
                num_scalar_prefetch=0,
                grid=(nt_d,),
                in_specs=[pl.BlockSpec((tile_d, 1), lambda i: (i, 0)),        # er (dst)
                          pl.BlockSpec((1, n_pad), lambda i: (0, 0)),         # el (all src, resident)
                          pl.BlockSpec((tile_d, z1_cols), lambda i: (i, 0)),  # z1 (dst, residual)
                          pl.BlockSpec((n_pad, f_pad), lambda i: (0, 0)),     # ft (all src, resident)
                          pl.BlockSpec((tile_d, n_pad), lambda i: (i, 0)),    # adj stripe (int8)
                          pl.BlockSpec((1, f_pad), lambda i: (0, 0))],        # b_gat
                out_specs=pl.BlockSpec((tile_d, f_pad), lambda i: (i, 0))),
            compiler_params=pltpu.CompilerParams(
                dimension_semantics=("parallel",),
                vmem_limit_bytes=vmem_limit),
            cost_estimate=cost,
        )(er_col, el_row, z1, ft, adj_i8, b_gat_pad)
    else:
        if ft_resident:
            ft_spec = pl.BlockSpec((n_pad, f_pad), lambda i, j: (0, 0))       # resident, sliced in-kernel
        else:
            ft_spec = pl.BlockSpec((tile_s, f_pad), lambda i, j: (j, 0))      # streamed per src tile
        out = pl.pallas_call(
            functools.partial(gat_stream_kernel, f_pad=f_pad, tile_s=tile_s,
                              ft_resident=ft_resident),
            out_shape=jax.ShapeDtypeStruct((n_pad, f_pad), jnp.float32),
            grid_spec=pltpu.PrefetchScalarGridSpec(
                num_scalar_prefetch=0,
                grid=(nt_d, nt_s),
                in_specs=[pl.BlockSpec((tile_d, 1), lambda i, j: (i, 0)),        # er (dst)
                          pl.BlockSpec((1, tile_s), lambda i, j: (0, j)),        # el (src, lane-wise)
                          pl.BlockSpec((tile_d, z1_cols), lambda i, j: (i, 0)),  # z1 (dst, residual)
                          ft_spec,                                               # ft (bf16)
                          # v5e: with resident ft, adj is the only O(N^2) HBM stream;
                          # sweep pipeline_mode=pl.Buffered(3) here if the DMA is exposed.
                          pl.BlockSpec((tile_d, tile_s), lambda i, j: (i, j)),   # adj (int8)
                          pl.BlockSpec((1, f_pad), lambda i, j: (0, 0))],        # b_gat
                out_specs=pl.BlockSpec((tile_d, f_pad), lambda i, j: (i, 0)),
                scratch_shapes=[pltpu.VMEM((tile_d, 1), jnp.float32),            # running max
                                pltpu.VMEM((tile_d, 1), jnp.float32),            # running denom
                                pltpu.VMEM((tile_d, f_pad), jnp.float32)]),      # accumulator
            compiler_params=pltpu.CompilerParams(
                dimension_semantics=("parallel", "arbitrary"),
                vmem_limit_bytes=vmem_limit),
            cost_estimate=cost,
        )(er_col, el_row, z1, ft, adj_i8, b_gat_pad)

    return out[:n, :f]


# ---------------------------------------------------------------------------
# Pure-JAX reference (f32 everywhere) for correctness checking
# ---------------------------------------------------------------------------
def graph_extractor_ref(x, adj, params):
    z1 = x @ params["w_enc"] + params["b_enc"]
    ft = z1 @ params["w_fc"]
    el = jnp.sum(ft * params["attn_l"], axis=-1, keepdims=True)
    er = jnp.sum(ft * params["attn_r"], axis=-1, keepdims=True)
    e = er + el.T
    e = jnp.where(e > 0, e, 0.2 * e)
    e = jnp.where(adj > 0, e, -1e30)
    p = jnp.exp(e - jnp.max(e, axis=-1, keepdims=True)) * (adj > 0)
    a = p / jnp.sum(p, axis=-1, keepdims=True)
    h = jnp.maximum(a @ ft + params["b_gat"], 0.0)
    return h + z1


if __name__ == "__main__":
    obs_dim = 44        # GraphExtractor default obs_dim
    features_dim = 64   # GraphExtractor default features_dim
    num_nodes = 200     # pads to 256 -> 2 dst tiles

    key = jax.random.PRNGKey(0)
    keys = jax.random.split(key, 8)

    # Deterministic synthetic parameters (shapes from the module's __init__).
    params = {
        "w_enc":  jax.random.normal(keys[0], (obs_dim, features_dim), jnp.float32) * 0.1,
        "b_enc":  jax.random.normal(keys[1], (1, features_dim), jnp.float32) * 0.1,
        "w_fc":   jax.random.normal(keys[2], (features_dim, features_dim), jnp.float32) * 0.1,
        "attn_l": jax.random.normal(keys[3], (1, features_dim), jnp.float32) * 0.1,
        "attn_r": jax.random.normal(keys[4], (1, features_dim), jnp.float32) * 0.1,
        "b_gat":  jax.random.normal(keys[5], (1, features_dim), jnp.float32) * 0.1,
    }

    # Node features (graph.ndata['h']).
    x = jax.random.normal(keys[6], (num_nodes, obs_dim), jnp.float32)

    # Random directed graph as dense adjacency adj[dst, src] with self-loops
    # (dgl.add_self_loop).
    adj = (jax.random.uniform(keys[7], (num_nodes, num_nodes)) < 0.05).astype(jnp.float32)
    adj = jnp.maximum(adj, jnp.eye(num_nodes, dtype=jnp.float32))

    ref = graph_extractor_ref(x, adj, params)

    # Default: small-graph path (resident ft/el, single src pass, no online softmax).
    out_small = graph_extractor(x, adj, params)
    jax.block_until_ready(out_small)
    assert out_small.shape == (num_nodes, features_dim)
    err_small = float(jnp.max(jnp.abs(out_small - ref)))
    # bf16 aggregation + approx reciprocal => slightly looser tolerance than pure f32.
    assert jnp.allclose(out_small, ref, atol=2e-2, rtol=2e-2), \
        f"small-path mismatch vs reference (max abs err {err_small})"

    # Also exercise the streaming online-softmax path (forced, small tiles -> 2x2 grid,
    # multi-step accumulation + resident-ft dynamic slicing).
    out_stream = graph_extractor(x, adj, params, force_streaming=True,
                                 tile_d=128, tile_s=128)
    jax.block_until_ready(out_stream)
    err_stream = float(jnp.max(jnp.abs(out_stream - ref)))
    assert jnp.allclose(out_stream, ref, atol=2e-2, rtol=2e-2), \
        f"streaming-path mismatch vs reference (max abs err {err_stream})"

    print("KERNEL_OK")
</pallas_src>

<mosaic_0001>
module attributes {stable_mosaic.version = 11 : i64} {
  func.func @projection_kernel(%arg0: i32, %arg1: memref<128x128xf32, #tpu.memory_space<vmem>>, %arg2: memref<128x256xf32, #tpu.memory_space<vmem>>, %arg3: memref<1x256xf32, #tpu.memory_space<vmem>>, %arg4: memref<128x128xf32, #tpu.memory_space<vmem>>, %arg5: memref<128x128xbf16, #tpu.memory_space<vmem>>) attributes {dimension_semantics = [#tpu.dimension_semantics<parallel>], iteration_bounds = array<i64: 2>, scalar_prefetch = 0 : i64, scratch_operands = 0 : i64, tpu.core_type = #tpu.core_type<tc>, window_params = [{transform_indices = @transform_0, window_bounds = array<i64: 128, 128>}, {pipeline_mode = #tpu.pipeline_mode<synchronous>, transform_indices = @transform_1, window_bounds = array<i64: 128, 256>}, {pipeline_mode = #tpu.pipeline_mode<synchronous>, transform_indices = @transform_2, window_bounds = array<i64: 1, 256>}, {transform_indices = @transform_3, window_bounds = array<i64: 128, 128>}, {transform_indices = @transform_4, window_bounds = array<i64: 128, 128>}]} {
    %c0 = arith.constant 0 : index
    %c0_0 = arith.constant 0 : index
    %0 = vector.load %arg1[%c0, %c0_0] : memref<128x128xf32, #tpu.memory_space<vmem>>, vector<128x128xf32>
    %c0_1 = arith.constant 0 : index
    %c0_2 = arith.constant 0 : index
    %1 = vector.load %arg2[%c0_1, %c0_2] : memref<128x256xf32, #tpu.memory_space<vmem>>, vector<128x256xf32>
    %cst = arith.constant dense<0.000000e+00> : vector<128x256xf32>
    %2 = tpu.matmul %0, %1, %cst {dimension_numbers = #tpu.dot_dimension_numbers<[1], [0], [0], [1], [0, 0, 1, 1], [], []>} : vector<128x128xf32>, vector<128x256xf32>, vector<128x256xf32> -> vector<128x256xf32>
    %c0_3 = arith.constant 0 : index
    %c0_4 = arith.constant 0 : index
    %3 = vector.load %arg3[%c0_3, %c0_4] : memref<1x256xf32, #tpu.memory_space<vmem>>, vector<1x256xf32>
    %4 = vector.broadcast %3 : vector<1x256xf32> to vector<128x256xf32>
    %5 = arith.addf %2, %4 : vector<128x256xf32>
    %6 = vector.extract_strided_slice %5 {offsets = [0, 0], sizes = [128, 128], strides = [1, 1]} : vector<128x256xf32> to vector<128x128xf32>
    %c0_5 = arith.constant 0 : index
    %c0_6 = arith.constant 0 : index
    %7 = vector.load %arg4[%c0_5, %c0_6] : memref<128x128xf32, #tpu.memory_space<vmem>>, vector<128x128xf32>
    tpu.vector_store %arg4[%c0_5, %c0_6], %6 {strides = array<i32>} : memref<128x128xf32, #tpu.memory_space<vmem>>, vector<128x128xf32>,
    %8 = vector.extract_strided_slice %5 {offsets = [0, 128], sizes = [128, 128], strides = [1, 1]} : vector<128x256xf32> to vector<128x128xf32>
    %9 = arith.truncf %8 : vector<128x128xf32> to vector<128x128xbf16>
    %c0_7 = arith.constant 0 : index
    %c0_8 = arith.constant 0 : index
    %10 = vector.load %arg5[%c0_7, %c0_8] : memref<128x128xbf16, #tpu.memory_space<vmem>>, vector<128x128xbf16>
    tpu.vector_store %arg5[%c0_7, %c0_8], %9 {strides = array<i32>} : memref<128x128xbf16, #tpu.memory_space<vmem>>, vector<128x128xbf16>,
    return
  }
  func.func @transform_0(%arg0: i32) -> (i32, i32) {
    %c0_i32 = arith.constant 0 : i32
    %c0_i32_0 = arith.constant 0 : i32
    return %arg0, %c0_i32 : i32, i32
  }
  func.func @transform_1(%arg0: i32) -> (i32, i32) {
    %c0_i32 = arith.constant 0 : i32
    %c0_i32_0 = arith.constant 0 : i32
    %c0_i32_1 = arith.constant 0 : i32
    return %c0_i32, %c0_i32_0 : i32, i32
  }
  func.func @transform_2(%arg0: i32) -> (i32, i32) {
    %c0_i32 = arith.constant 0 : i32
    %c0_i32_0 = arith.constant 0 : i32
    %c0_i32_1 = arith.constant 0 : i32
    return %c0_i32, %c0_i32_0 : i32, i32
  }
  func.func @transform_3(%arg0: i32) -> (i32, i32) {
    %c0_i32 = arith.constant 0 : i32
    %c0_i32_0 = arith.constant 0 : i32
    return %arg0, %c0_i32 : i32, i32
  }
  func.func @transform_4(%arg0: i32) -> (i32, i32) {
    %c0_i32 = arith.constant 0 : i32
    %c0_i32_0 = arith.constant 0 : i32
    return %arg0, %c0_i32 : i32, i32
  }
}

</mosaic_0001>

<llo_original>
// kernel: tpu_custom_call.1
$region0: #{tpu_custom_call.1}
  #allocation0 [shape = 'u32[]', space=smem, size = 0x4, offset = 0x4, fixed_abs, tag = 'smem constant byte address 0x4 - core index']
  #allocation1 [shape = 'u32[144,128]{1,0:T(1,128)}', space=vmem, size = 0x12000, scoped, tag = 'internal scratch']
  %s0 = inlined_call_operand.hbm [shape: f32[256,128], index: 0, kind: input, shape index: {}]
  %s1 = inlined_call_operand.hbm [shape: f32[128,256], index: 1, kind: input, shape index: {}]
  %s2 = inlined_call_operand.vmem [shape: f32[1,256], index: 2, kind: input, shape index: {}]
  %s3 = inlined_call_operand.hbm [shape: f32[256,128], index: 3, kind: output, shape index: {0}]
  %s4 = inlined_call_operand.hbm [shape: bf16[256,128], index: 4, kind: output, shape index: {1}]
  %5 = xla_tuple %s3, %s4
  %s6 = sld [smem:[#allocation0]]
  $region61: #{tpu_custom_call.1} parent=0
    _
  %s8 = ssub.s32 1, %s6
  %s9 = scalar_select 0, %s8, %s6
  $region1: #{tpu_custom_call.1} parent=0
    #allocation2 [shape = 'u8[131072]{0}', space=vmem, size = 0x20000, scoped, tag = 'input window, operand 0']
    #allocation3 [shape = 's32[2]{0}', space=sflag, size = 0x8, scoped, tag = 'scoped memory for tpu_custom_call.1']
    #allocation4 [shape = 's32[2]{0}', space=sflag, size = 0x8, scoped, tag = 'scoped memory for tpu_custom_call.1']
    #allocation5 [shape = 'u8[131072]{0}', space=vmem, size = 0x20000, scoped, tag = 'input window, operand 1, single buffered']
    #allocation6 [shape = 's32[1]{0}', space=sflag, size = 0x4, scoped, tag = 'scoped memory for tpu_custom_call.1']
    #allocation7 [shape = 'u8[131072]{0}', space=vmem, size = 0x20000, scoped, tag = 'output window, operand 0']
    #allocation8 [shape = 'u8[65536]{0}', space=vmem, size = 0x10000, scoped, tag = 'output window, operand 1']
    #allocation9 [shape = 's32[2]{0}', space=sflag, size = 0x8, scoped, tag = 'scoped memory for tpu_custom_call.1']
    %10 = vsyncpa [#allocation3], 0
    %s11 = scalar_lea.sflag [#allocation3], 1
    %12 = vsyncpa %s11, 0
    %13 = vsyncpa [#allocation6], 0
    %14 = vsyncpa [#allocation4], 0
    %s15 = scalar_lea.sflag [#allocation4], 1
    %16 = vsyncpa %s15, 0
    %17 = vsyncpa [#allocation9], 0
    %s18 = scalar_lea.sflag [#allocation9], 1
    %19 = vsyncpa %s18, 0
    loop: start=0, step=1, limit=4
    $region2: #{tpu_custom_call.1} parent=1 // loop_pre_header
      _
    $region3: #{tpu_custom_call.1} parent=1 // loop_header
      %s21 = sphi 0, %s25
      %p22 = scmp.ge.s32.totalorder %s21, 4
      %s31 = sphi 0, %s33
      %s34 = sphi 0, %s31
      %s35 = sphi 0, %s34
      %s51 = sphi 0, %s35
      %s55 = sphi 0, %s55
      %s57 = sphi 0, %s55
      %s58 = sphi 0, %s57
      %s72 = sphi 0, %s58
      %s76 = sphi 0, %s76
      %s78 = sphi 0, %s76
      %s79 = sphi 0, %s78
      %s93 = sphi 0, %s79
      %s99 = sphi 0, %s101
      %s102 = sphi 0, %s99
      %s103 = sphi 0, %s102
      %s119 = sphi 0, %s103
      %s125 = sphi 0, %s127
      %s128 = sphi 0, %s125
      %s129 = sphi 0, %s128
      %s145 = sphi 0, %s129
    $region4: #{tpu_custom_call.1} parent=1 // loop_header_branch
      %24 = sbr.rel (%p22) target = $region8
    $region5: #{tpu_custom_call.1} parent=1 // loop_body
      %s26 = ssub.s32 %s21, 1
      %s27 = ssub.s32 %s21, 2
      %s28 = sadd.s32 %s21, 1
      %s29 = ssub.s32 %s21, %s28
      %p30 = scmp.eq.s32.totalorder %s29, 0
      %s32 = sadd.s32 %s31, 1
      %s33 = scalar_select %p30, %s31, %s32
      %p36 = pneg %p30
      %p37 = scmp.eq.s32.totalorder %s21, 1
      %p38 = por %p36, %p37
      %p39 = scmp.ne.s32.totalorder %s31, %s34
      %p40 = scmp.eq.s32.totalorder %s21, 0
      %p41 = por %p39, %p40
      %p42 = scmp.ne.s32.totalorder %s31, %s34
      %p43 = scmp.eq.s32.totalorder %s26, 1
      %p44 = por %p42, %p43
      %p45 = scmp.ne.s32.totalorder %s34, %s35
      %p46 = scmp.eq.s32.totalorder %s26, 0
      %p47 = por %p45, %p46
      %p48 = scmp.ne.s32.totalorder %s34, %s35
      %p49 = scmp.eq.s32.totalorder %s27, 1
      %p50 = por %p48, %p49
      %p52 = scmp.ne.s32.totalorder %s35, %s51
      %p53 = scmp.eq.s32.totalorder %s27, 0
      %p54 = por %p52, %p53
      %s56 = sadd.s32 %s55, 1
      %p59 = scmp.eq.s32.totalorder %s21, 1
      %p60 = scmp.ne.s32.totalorder %s55, %s57
      %p61 = scmp.eq.s32.totalorder %s21, 0
      %p62 = por %p60, %p61
      %p63 = scmp.ne.s32.totalorder %s55, %s57
      %p64 = scmp.eq.s32.totalorder %s26, 1
      %p65 = por %p63, %p64
      %p66 = scmp.ne.s32.totalorder %s57, %s58
      %p67 = scmp.eq.s32.totalorder %s26, 0
      %p68 = por %p66, %p67
      %p69 = scmp.ne.s32.totalorder %s57, %s58
      %p70 = scmp.eq.s32.totalorder %s27, 1
      %p71 = por %p69, %p70
      %p73 = scmp.ne.s32.totalorder %s58, %s72
      %p74 = scmp.eq.s32.totalorder %s27, 0
      %p75 = por %p73, %p74
      %s77 = sadd.s32 %s76, 1
      %p80 = scmp.eq.s32.totalorder %s21, 1
      %p81 = scmp.ne.s32.totalorder %s76, %s78
      %p82 = scmp.eq.s32.totalorder %s21, 0
      %p83 = por %p81, %p82
      %p84 = scmp.ne.s32.totalorder %s76, %s78
      %p85 = scmp.eq.s32.totalorder %s26, 1
      %p86 = por %p84, %p85
      %p87 = scmp.ne.s32.totalorder %s78, %s79
      %p88 = scmp.eq.s32.totalorder %s26, 0
      %p89 = por %p87, %p88
      %p90 = scmp.ne.s32.totalorder %s78, %s79
      %p91 = scmp.eq.s32.totalorder %s27, 1
      %p92 = por %p90, %p91
      %p94 = scmp.ne.s32.totalorder %s79, %s93
      %p95 = scmp.eq.s32.totalorder %s27, 0
      %p96 = por %p94, %p95
      %s97 = ssub.s32 %s21, %s28
      %p98 = scmp.eq.s32.totalorder %s97, 0
      %s100 = sadd.s32 %s99, 1
      %s101 = scalar_select %p98, %s99, %s100
      %p104 = pneg %p98
      %p105 = scmp.eq.s32.totalorder %s21, 1
      %p106 = por %p104, %p105
      %p107 = scmp.ne.s32.totalorder %s99, %s102
      %p108 = scmp.eq.s32.totalorder %s21, 0
      %p109 = por %p107, %p108
      %p110 = scmp.ne.s32.totalorder %s99, %s102
      %p111 = scmp.eq.s32.totalorder %s26, 1
      %p112 = por %p110, %p111
      %p113 = scmp.ne.s32.totalorder %s102, %s103
      %p114 = scmp.eq.s32.totalorder %s26, 0
      %p115 = por %p113, %p114
      %p116 = scmp.ne.s32.totalorder %s102, %s103
      %p117 = scmp.eq.s32.totalorder %s27, 1
      %p118 = por %p116, %p117
      %p120 = scmp.ne.s32.totalorder %s103, %s119
      %p121 = scmp.eq.s32.totalorder %s27, 0
      %p122 = por %p120, %p121
      %s123 = ssub.s32 %s21, %s28
      %p124 = scmp.eq.s32.totalorder %s123, 0
      %s126 = sadd.s32 %s125, 1
      %s127 = scalar_select %p124, %s125, %s126
      %p130 = pneg %p124
      %p131 = scmp.eq.s32.totalorder %s21, 1
      %p132 = por %p130, %p131
      %p133 = scmp.ne.s32.totalorder %s125, %s128
      %p134 = scmp.eq.s32.totalorder %s21, 0
      %p135 = por %p133, %p134
      %p136 = scmp.ne.s32.totalorder %s125, %s128
      %p137 = scmp.eq.s32.totalorder %s26, 1
      %p138 = por %p136, %p137
      %p139 = scmp.ne.s32.totalorder %s128, %s129
      %p140 = scmp.eq.s32.totalorder %s26, 0
      %p141 = por %p139, %p140
      %p142 = scmp.ne.s32.totalorder %s128, %s129
      %p143 = scmp.eq.s32.totalorder %s27, 1
      %p144 = por %p142, %p143
      %p146 = scmp.ne.s32.totalorder %s129, %s145
      %p147 = scmp.eq.s32.totalorder %s27, 0
      %p148 = por %p146, %p147
      %p149 = scmp.le.s32.totalorder 1, %s21
      %p150 = scmp.lt.s32.totalorder %s21, 3
      %p151 = pnand %p149, %p150
      %p152 = pneg %p151
      // Predicated region
      $region9: #{tpu_custom_call.1} parent=5 // pred_check
        _
      $region10: #{tpu_custom_call.1} parent=5 // pred_check_branch
        %154 = sbr.rel (%p151) target = $region12
      $region11: #{tpu_custom_call.1} parent=5 // pred_region
        %s155 = ssub.s32 %s21, 1
        // Predicated region
        $region13: #{tpu_custom_call.1} parent=11 // pred_check
          %p156 = pneg %p68
        $region14: #{tpu_custom_call.1} parent=11 // pred_check_branch
          %158 = sbr.rel (%p156) target = $region16
        $region15: #{tpu_custom_call.1} parent=11 // pred_region
          %s160 = ssub.s32 4096, 4096
          %161 = vsyncadd [#allocation6], %s160
          %s162 = sshll.u32 [#allocation5], 4
          %s163 = int_to_ptr.vmem [resolvable:$true] %s162
          %168 = dma.hbm_to_vmem [thread:$0]  %s1, 4096, %s163, [#allocation6], 256, 256, 16
        $region16: #{tpu_custom_call.1} parent=11 // pred_fallthru
          _
        // Predicated region
        $region17: #{tpu_custom_call.1} parent=11 // pred_check
          %p169 = pneg %p89
        $region18: #{tpu_custom_call.1} parent=11 // pred_check_branch
          %171 = sbr.rel (%p169) target = $region20
        $region19: #{tpu_custom_call.1} parent=11 // pred_region
          _
        $region20: #{tpu_custom_call.1} parent=11 // pred_fallthru
          _
      $region12: #{tpu_custom_call.1} parent=5 // pred_fallthru
        _
      %p172 = scmp.lt.s32.totalorder %s21, 2
      // Predicated region
      $region21: #{tpu_custom_call.1} parent=5 // pred_check
        %p173 = pneg %p172
      $region22: #{tpu_custom_call.1} parent=5 // pred_check_branch
        %175 = sbr.rel (%p173) target = $region24
      $region23: #{tpu_custom_call.1} parent=5 // pred_region
        // Predicated region
        $region25: #{tpu_custom_call.1} parent=23 // pred_check
          %p176 = pneg %p41
        $region26: #{tpu_custom_call.1} parent=23 // pred_check_branch
          %178 = sbr.rel (%p176) target = $region28
        $region27: #{tpu_custom_call.1} parent=23 // pred_region
          %s179 = sand.u32 %s31, 1
          %s180 = scalar_lea.sflag [#allocation3], %s179
          %s181 = sand.u32 %s31, 1
          %s182 = smul.addr %s181, 128
          %s183 = scalar_lea.vmem [#allocation2], %s182
          %s184 = smul.u32 16, %s21
          %s186 = ssub.s32 2048, 2048
          %187 = vsyncadd %s180, %s186
          %s188 = smul.addr %s184, 128
          %s189 = scalar_lea.hbm %s0, %s188
          %s190 = sshll.u32 %s183, 4
          %s191 = int_to_ptr.vmem [resolvable:$true] %s190
          %196 = dma.hbm_to_vmem [thread:$0]  %s189, 2048, %s191, %s180, 128, 128, 8
        $region28: #{tpu_custom_call.1} parent=23 // pred_fallthru
          _
      $region24: #{tpu_custom_call.1} parent=5 // pred_fallthru
        _
      %p197 = scmp.le.s32.totalorder 1, %s21
      %p198 = scmp.lt.s32.totalorder %s21, 3
      %p199 = pnand %p197, %p198
      %p200 = pneg %p199
      // Predicated region
      $region29: #{tpu_custom_call.1} parent=5 // pred_check
        _
      $region30: #{tpu_custom_call.1} parent=5 // pred_check_branch
        %202 = sbr.rel (%p199) target = $region32
      $region31: #{tpu_custom_call.1} parent=5 // pred_region
        %s203 = ssub.s32 %s21, 1
        %s204 = sand.u32 %s34, 1
        %s205 = scalar_lea.sflag [#allocation3], %s204
        %s206 = sand.u32 %s34, 1
        %s207 = smul.addr %s206, 128
        %s208 = scalar_lea.vmem [#allocation2], %s207
        // Predicated region
        $region33: #{tpu_custom_call.1} parent=31 // pred_check
          %p209 = pneg %p47
        $region34: #{tpu_custom_call.1} parent=31 // pred_check_branch
          %211 = sbr.rel (%p209) target = $region36
        $region35: #{tpu_custom_call.1} parent=31 // pred_region
          %212 = dma.done %s205, 2048
        $region36: #{tpu_custom_call.1} parent=31 // pred_fallthru
          _
        // Predicated region
        $region37: #{tpu_custom_call.1} parent=31 // pred_check
          %p213 = pneg %p68
        $region38: #{tpu_custom_call.1} parent=31 // pred_check_branch
          %215 = sbr.rel (%p213) target = $region40
        $region39: #{tpu_custom_call.1} parent=31 // pred_region
          %216 = dma.done [#allocation6], 4096
        $region40: #{tpu_custom_call.1} parent=31 // pred_fallthru
          _
        %s217 = sand.u32 %s34, 1
        %s218 = scalar_lea.sflag [#allocation3], %s217
        %s219 = sand.u32 %s34, 1
        %s220 = smul.addr %s219, 128
        %s221 = scalar_lea.vmem [#allocation2], %s220
        %p222 = pneg %p47
        %p223 = pneg %p44
        %p224 = pneg %p68
        %p225 = pneg %p65
        %p226 = pneg %p89
        %p227 = pneg %p86
        %p228 = pneg %p115
        %p229 = pneg %p112
        %s230 = sand.u32 %s102, 1
        %s231 = scalar_lea.sflag [#allocation4], %s230
        %s232 = sand.u32 %s102, 1
        %s233 = smul.addr %s232, 128
        %s234 = scalar_lea.vmem [#allocation7], %s233
        %p235 = pneg %p141
        %p236 = pneg %p138
        %s237 = sand.u32 %s128, 1
        %s238 = scalar_lea.sflag [#allocation9], %s237
        %s239 = sand.u32 %s128, 1
        %s240 = smul.addr %s239, 64
        %s241 = scalar_lea.vmem [#allocation8], %s240
        %s242 = smul.u32 16, %s26
        %s243 = smul.u32 16, %s26
        %s244 = smul.u32 16, %s26
        %v245 = vld [vmem:[%s208] sm:$0xff]
        %v246 = vld [vmem:[%s208 + $0x8] sm:$0xff]
        %v247 = vld [vmem:[%s208 + $0x10] sm:$0xff]
        %v248 = vld [vmem:[%s208 + $0x18] sm:$0xff]
        %v249 = vld [vmem:[%s208 + $0x20] sm:$0xff]
        %v250 = vld [vmem:[%s208 + $0x28] sm:$0xff]
        %v251 = vld [vmem:[%s208 + $0x30] sm:$0xff]
        %v252 = vld [vmem:[%s208 + $0x38] sm:$0xff]
        %v253 = vld [vmem:[%s208 + $0x40] sm:$0xff]
        %v254 = vld [vmem:[%s208 + $0x48] sm:$0xff]
        %v255 = vld [vmem:[%s208 + $0x50] sm:$0xff]
        %v256 = vld [vmem:[%s208 + $0x58] sm:$0xff]
        %v257 = vld [vmem:[%s208 + $0x60] sm:$0xff]
        %v258 = vld [vmem:[%s208 + $0x68] sm:$0xff]
        %v259 = vld [vmem:[%s208 + $0x70] sm:$0xff]
        %v260 = vld [vmem:[%s208 + $0x78] sm:$0xff]
        %v261 = vld [vmem:[#allocation5] sm:$0xff]
        %v262 = vld [vmem:[#allocation5 + $0x8] sm:$0xff]
        %v263 = vld [vmem:[#allocation5 + $0x10] sm:$0xff]
        %v264 = vld [vmem:[#allocation5 + $0x18] sm:$0xff]
        %v265 = vld [vmem:[#allocation5 + $0x20] sm:$0xff]
        %v266 = vld [vmem:[#allocation5 + $0x28] sm:$0xff]
        %v267 = vld [vmem:[#allocation5 + $0x30] sm:$0xff]
        %v268 = vld [vmem:[#allocation5 + $0x38] sm:$0xff]
        %v269 = vld [vmem:[#allocation5 + $0x40] sm:$0xff]
        %v270 = vld [vmem:[#allocation5 + $0x48] sm:$0xff]
        %v271 = vld [vmem:[#allocation5 + $0x50] sm:$0xff]
        %v272 = vld [vmem:[#allocation5 + $0x58] sm:$0xff]
        %v273 = vld [vmem:[#allocation5 + $0x60] sm:$0xff]
        %v274 = vld [vmem:[#allocation5 + $0x68] sm:$0xff]
        %v275 = vld [vmem:[#allocation5 + $0x70] sm:$0xff]
        %v276 = vld [vmem:[#allocation5 + $0x78] sm:$0xff]
        %v277 = vld [vmem:[#allocation5 + $0x80] sm:$0xff]
        %v278 = vld [vmem:[#allocation5 + $0x88] sm:$0xff]
        %v279 = vld [vmem:[#allocation5 + $0x90] sm:$0xff]
        %v280 = vld [vmem:[#allocation5 + $0x98] sm:$0xff]
        %v281 = vld [vmem:[#allocation5 + $0xa0] sm:$0xff]
        %v282 = vld [vmem:[#allocation5 + $0xa8] sm:$0xff]
        %v283 = vld [vmem:[#allocation5 + $0xb0] sm:$0xff]
        %v284 = vld [vmem:[#allocation5 + $0xb8] sm:$0xff]
        %v285 = vld [vmem:[#allocation5 + $0xc0] sm:$0xff]
        %v286 = vld [vmem:[#allocation5 + $0xc8] sm:$0xff]
        %v287 = vld [vmem:[#allocation5 + $0xd0] sm:$0xff]
        %v288 = vld [vmem:[#allocation5 + $0xd8] sm:$0xff]
        %v289 = vld [vmem:[#allocation5 + $0xe0] sm:$0xff]
        %v290 = vld [vmem:[#allocation5 + $0xe8] sm:$0xff]
        %v291 = vld [vmem:[#allocation5 + $0xf0] sm:$0xff]
        %v292 = vld [vmem:[#allocation5 + $0xf8] sm:$0xff]
        %v293 = vld [vmem:[%s2] sm:$0x3]
        %v295 = vlaneseq
        %v296 = vshrl.u32 %v295, 7
        %v297 = vsub.s32 0, %v296
        %v298 = vrot.slane %v293, %v297
        %v299 = vlaneseq
        %v300 = vshrl.u32 %v299, 7
        %v301 = vsub.s32 1, %v300
        %v302 = vrot.slane %v293, %v301
        %305 = vmatprep.subr.mxu0 %v262
        %306 = vmatpush1.msra.mxu0 %v261
        %307 = vmatprep.subr.mxu0 %v264
        %308 = vmatpush1.msra.mxu0 %v263
        %309 = vmatprep.subr.mxu0 %v266
        %310 = vmatpush1.msra.mxu0 %v265
        %311 = vmatprep.subr.mxu0 %v268
        %312 = vmatpush1.msra.mxu0 %v267
        %313 = vmatprep.subr.mxu0 %v270
        %314 = vmatpush1.msra.mxu0 %v269
        %315 = vmatprep.subr.mxu0 %v272
        %316 = vmatpush1.msra.mxu0 %v271
        %317 = vmatprep.subr.mxu0 %v274
        %318 = vmatpush1.msra.mxu0 %v273
        %319 = vmatprep.subr.mxu0 %v276
        %320 = vmatpush1.msra.mxu0 %v275
        %321 = vmatprep.subr.mxu0 %v278
        %322 = vmatpush1.msra.mxu0 %v277
        %323 = vmatprep.subr.mxu0 %v280
        %324 = vmatpush1.msra.mxu0 %v279
        %325 = vmatprep.subr.mxu0 %v282
        %326 = vmatpush1.msra.mxu0 %v281
        %327 = vmatprep.subr.mxu0 %v284
        %328 = vmatpush1.msra.mxu0 %v283
        %329 = vmatprep.subr.mxu0 %v286
        %330 = vmatpush1.msra.mxu0 %v285
        %331 = vmatprep.subr.mxu0 %v288
        %332 = vmatpush1.msra.mxu0 %v287
        %333 = vmatprep.subr.mxu0 %v290
        %334 = vmatpush1.msra.mxu0 %v289
        %335 = vmatprep.subr.mxu0 %v292
        %336 = vmatpush1.msra.mxu0 %v291
        %337 = vmatprep.subr.mxu0 0.0
        %338 = vmatpush1.msra.mxu0 0.0
        %339 = vmatprep.subr.mxu0 0.0
        %340 = vmatpush1.msra.mxu0 0.0
        %341 = vmatprep.subr.mxu0 0.0
        %342 = vmatpush1.msra.mxu0 0.0
        %343 = vmatprep.subr.mxu0 0.0
        %344 = vmatpush1.msra.mxu0 0.0
        %345 = vmatprep.subr.mxu0 0.0
        %346 = vmatpush1.msra.mxu0 0.0
        %347 = vmatprep.subr.mxu0 0.0
        %348 = vmatpush1.msra.mxu0 0.0
        %349 = vmatprep.subr.mxu0 0.0
        %350 = vmatpush1.msra.mxu0 0.0
        %351 = vmatprep.subr.mxu0 0.0
        %352 = vmatpush1.msra.mxu0 0.0
        %353 = vmatprep.subr.mxu0 0.0
        %354 = vmatpush1.msra.mxu0 0.0
        %355 = vmatprep.subr.mxu0 0.0
        %356 = vmatpush1.msra.mxu0 0.0
        %357 = vmatprep.subr.mxu0 0.0
        %358 = vmatpush1.msra.mxu0 0.0
        %359 = vmatprep.subr.mxu0 0.0
        %360 = vmatpush1.msra.mxu0 0.0
        %361 = vmatprep.subr.mxu0 0.0
        %362 = vmatpush1.msra.mxu0 0.0
        %363 = vmatprep.subr.mxu0 0.0
        %364 = vmatpush1.msra.mxu0 0.0
        %365 = vmatprep.subr.mxu0 0.0
        %366 = vmatpush1.msra.mxu0 0.0
        %367 = vmatprep.subr.mxu0 0.0
        %368 = vmatpush1.msra.mxu0 0.0
        %369 = vmatprep.mubr.f32.mxu0 0.0
        %370 = vmatmul.mubr.f32.gmra.mrb[0].mxu0 %v245
        %v371 = vpop.f32.mrb[0].mxu0
        %v372 = vadd.f32 %v298, %v371
        %v373 = vpop.f32.mrb[0].mxu0
        %v374 = vadd.f32 %v302, %v373
        %375 = vmatprep.mubr.f32.mxu0 0.0
        %376 = vmatmul.mubr.f32.gmra.mrb[0].mxu0 %v246
        %v377 = vpop.f32.mrb[0].mxu0
        %v378 = vadd.f32 %v298, %v377
        %v379 = vpop.f32.mrb[0].mxu0
        %v380 = vadd.f32 %v302, %v379
        %381 = vmatprep.mubr.f32.mxu0 0.0
        %382 = vmatmul.mubr.f32.gmra.mrb[0].mxu0 %v247
        %v383 = vpop.f32.mrb[0].mxu0
        %v384 = vadd.f32 %v298, %v383
        %v385 = vpop.f32.mrb[0].mxu0
        %v386 = vadd.f32 %v302, %v385
        %387 = vmatprep.mubr.f32.mxu0 0.0
        %388 = vmatmul.mubr.f32.gmra.mrb[0].mxu0 %v248
        %v389 = vpop.f32.mrb[0].mxu0
        %v390 = vadd.f32 %v298, %v389
        %v391 = vpop.f32.mrb[0].mxu0
        %v392 = vadd.f32 %v302, %v391
        %393 = vmatprep.mubr.f32.mxu0 0.0
        %394 = vmatmul.mubr.f32.gmra.mrb[0].mxu0 %v249
        %v395 = vpop.f32.mrb[0].mxu0
        %v396 = vadd.f32 %v298, %v395
        %v397 = vpop.f32.mrb[0].mxu0
        %v398 = vadd.f32 %v302, %v397
        %399 = vmatprep.mubr.f32.mxu0 0.0
        %400 = vmatmul.mubr.f32.gmra.mrb[0].mxu0 %v250
        %v401 = vpop.f32.mrb[0].mxu0
        %v402 = vadd.f32 %v298, %v401
        %v403 = vpop.f32.mrb[0].mxu0
        %v404 = vadd.f32 %v302, %v403
        %405 = vmatprep.mubr.f32.mxu0 0.0
        %406 = vmatmul.mubr.f32.gmra.mrb[0].mxu0 %v251
        %v407 = vpop.f32.mrb[0].mxu0
        %v408 = vadd.f32 %v298, %v407
        %v409 = vpop.f32.mrb[0].mxu0
        %v410 = vadd.f32 %v302, %v409
        %411 = vmatprep.mubr.f32.mxu0 0.0
        %412 = vmatmul.mubr.f32.gmra.mrb[0].mxu0 %v252
        %v413 = vpop.f32.mrb[0].mxu0
        %v414 = vadd.f32 %v298, %v413
        %v415 = vpop.f32.mrb[0].mxu0
        %v416 = vadd.f32 %v302, %v415
        %417 = vmatprep.mubr.f32.mxu0 0.0
        %418 = vmatmul.mubr.f32.gmra.mrb[0].mxu0 %v253
        %v419 = vpop.f32.mrb[0].mxu0
        %v420 = vadd.f32 %v298, %v419
        %v421 = vpop.f32.mrb[0].mxu0
        %v422 = vadd.f32 %v302, %v421
        %423 = vmatprep.mubr.f32.mxu0 0.0
        %424 = vmatmul.mubr.f32.gmra.mrb[0].mxu0 %v254
        %v425 = vpop.f32.mrb[0].mxu0
        %v426 = vadd.f32 %v298, %v425
        %v427 = vpop.f32.mrb[0].mxu0
        %v428 = vadd.f32 %v302, %v427
        %429 = vmatprep.mubr.f32.mxu0 0.0
        %430 = vmatmul.mubr.f32.gmra.mrb[0].mxu0 %v255
        %v431 = vpop.f32.mrb[0].mxu0
        %v432 = vadd.f32 %v298, %v431
        %v433 = vpop.f32.mrb[0].mxu0
        %v434 = vadd.f32 %v302, %v433
        %435 = vmatprep.mubr.f32.mxu0 0.0
        %436 = vmatmul.mubr.f32.gmra.mrb[0].mxu0 %v256
        %v437 = vpop.f32.mrb[0].mxu0
        %v438 = vadd.f32 %v298, %v437
        %v439 = vpop.f32.mrb[0].mxu0
        %v440 = vadd.f32 %v302, %v439
        %441 = vmatprep.mubr.f32.mxu0 0.0
        %442 = vmatmul.mubr.f32.gmra.mrb[0].mxu0 %v257
        %v443 = vpop.f32.mrb[0].mxu0
        %v444 = vadd.f32 %v298, %v443
        %v445 = vpop.f32.mrb[0].mxu0
        %v446 = vadd.f32 %v302, %v445
        %447 = vmatprep.mubr.f32.mxu0 0.0
        %448 = vmatmul.mubr.f32.gmra.mrb[0].mxu0 %v258
        %v449 = vpop.f32.mrb[0].mxu0
        %v450 = vadd.f32 %v298, %v449
        %v451 = vpop.f32.mrb[0].mxu0
        %v452 = vadd.f32 %v302, %v451
        %453 = vmatprep.mubr.f32.mxu0 0.0
        %454 = vmatmul.mubr.f32.gmra.mrb[0].mxu0 %v259
        %v455 = vpop.f32.mrb[0].mxu0
        %v456 = vadd.f32 %v298, %v455
        %v457 = vpop.f32.mrb[0].mxu0
        %v458 = vadd.f32 %v302, %v457
        %459 = vmatprep.mubr.f32.mxu0 0.0
        %460 = vmatmul.mubr.f32.gmra.mrb[0].mxu0 %v260
        %v461 = vpop.f32.mrb[0].mxu0
        %v462 = vadd.f32 %v298, %v461
        %v463 = vpop.f32.mrb[0].mxu0
        %v464 = vadd.f32 %v302, %v463
        %465 = vdwg.mxu0
        %466 = vst [vmem:[%s234] sm:$0xff] %v372
        %467 = vst [vmem:[%s234 + $0x8] sm:$0xff] %v378
        %468 = vst [vmem:[%s234 + $0x10] sm:$0xff] %v384
        %469 = vst [vmem:[%s234 + $0x18] sm:$0xff] %v390
        %470 = vst [vmem:[%s234 + $0x20] sm:$0xff] %v396
        %471 = vst [vmem:[%s234 + $0x28] sm:$0xff] %v402
        %472 = vst [vmem:[%s234 + $0x30] sm:$0xff] %v408
        %473 = vst [vmem:[%s234 + $0x38] sm:$0xff] %v414
        %474 = vst [vmem:[%s234 + $0x40] sm:$0xff] %v420
        %475 = vst [vmem:[%s234 + $0x48] sm:$0xff] %v426
        %476 = vst [vmem:[%s234 + $0x50] sm:$0xff] %v432
        %477 = vst [vmem:[%s234 + $0x58] sm:$0xff] %v438
        %478 = vst [vmem:[%s234 + $0x60] sm:$0xff] %v444
        %479 = vst [vmem:[%s234 + $0x68] sm:$0xff] %v450
        %480 = vst [vmem:[%s234 + $0x70] sm:$0xff] %v456
        %481 = vst [vmem:[%s234 + $0x78] sm:$0xff] %v462
        %v482 = vpack.c.bf16 %v380, %v374
        %v483 = vpack.c.bf16 %v392, %v386
        %v484 = vpack.c.bf16 %v404, %v398
        %v485 = vpack.c.bf16 %v416, %v410
        %v486 = vpack.c.bf16 %v428, %v422
        %v487 = vpack.c.bf16 %v440, %v434
        %v488 = vpack.c.bf16 %v452, %v446
        %v489 = vpack.c.bf16 %v464, %v458
        %v498 = vunpack.c.l.b16 %v482
        %v499 = vunpack.c.h.b16 %v482
        %v500 = vunpack.c.l.b16 %v483
        %v501 = vunpack.c.h.b16 %v483
        %v502 = vunpack.c.l.b16 %v484
        %v503 = vunpack.c.h.b16 %v484
        %v504 = vunpack.c.l.b16 %v485
        %v505 = vunpack.c.h.b16 %v485
        %v506 = vunpack.c.l.b16 %v486
        %v507 = vunpack.c.h.b16 %v486
        %v508 = vunpack.c.l.b16 %v487
        %v509 = vunpack.c.h.b16 %v487
        %v510 = vunpack.c.l.b16 %v488
        %v511 = vunpack.c.h.b16 %v488
        %v512 = vunpack.c.l.b16 %v489
        %v513 = vunpack.c.h.b16 %v489
        %v514 = vpack.c.b16 %v498, %v498
        %v515 = vpack.c.b16 %v499, %v499
        %v516 = vpack.c.b16 %v500, %v500
        %v517 = vpack.c.b16 %v501, %v501
        %v518 = vpack.c.b16 %v502, %v502
        %v519 = vpack.c.b16 %v503, %v503
        %v520 = vpack.c.b16 %v504, %v504
        %v521 = vpack.c.b16 %v505, %v505
        %v522 = vpack.c.b16 %v506, %v506
        %v523 = vpack.c.b16 %v507, %v507
        %v524 = vpack.c.b16 %v508, %v508
        %v525 = vpack.c.b16 %v509, %v509
        %v526 = vpack.c.b16 %v510, %v510
        %v527 = vpack.c.b16 %v511, %v511
        %v528 = vpack.c.b16 %v512, %v512
        %v529 = vpack.c.b16 %v513, %v513
        %546 = vst [vmem:[%s241] sm:$0xf] %v514
        %547 = vst [vmem:[%s241 + $0x4] sm:$0xf] %v515
        %548 = vst [vmem:[%s241 + $0x8] sm:$0xf] %v516
        %549 = vst [vmem:[%s241 + $0xc] sm:$0xf] %v517
        %550 = vst [vmem:[%s241 + $0x10] sm:$0xf] %v518
        %551 = vst [vmem:[%s241 + $0x14] sm:$0xf] %v519
        %552 = vst [vmem:[%s241 + $0x18] sm:$0xf] %v520
        %553 = vst [vmem:[%s241 + $0x1c] sm:$0xf] %v521
        %554 = vst [vmem:[%s241 + $0x20] sm:$0xf] %v522
        %555 = vst [vmem:[%s241 + $0x24] sm:$0xf] %v523
        %556 = vst [vmem:[%s241 + $0x28] sm:$0xf] %v524
        %557 = vst [vmem:[%s241 + $0x2c] sm:$0xf] %v525
        %558 = vst [vmem:[%s241 + $0x30] sm:$0xf] %v526
        %559 = vst [vmem:[%s241 + $0x34] sm:$0xf] %v527
        %560 = vst [vmem:[%s241 + $0x38] sm:$0xf] %v528
        %561 = vst [vmem:[%s241 + $0x3c] sm:$0xf] %v529
        %s562 = sand.u32 %s102, 1
        %s563 = scalar_lea.sflag [#allocation4], %s562
        %s564 = sand.u32 %s102, 1
        %s565 = smul.addr %s564, 128
        %s566 = scalar_lea.vmem [#allocation7], %s565
        %s567 = sand.u32 %s128, 1
        %s568 = scalar_lea.sflag [#allocation9], %s567
        %s569 = sand.u32 %s128, 1
        %s570 = smul.addr %s569, 64
        %s571 = scalar_lea.vmem [#allocation8], %s570
        // Predicated region
        $region41: #{tpu_custom_call.1} parent=31 // pred_check
          %p572 = pneg %p112
        $region42: #{tpu_custom_call.1} parent=31 // pred_check_branch
          %574 = sbr.rel (%p572) target = $region44
        $region43: #{tpu_custom_call.1} parent=31 // pred_region
          %s575 = smul.u32 16, %s26
          %s577 = ssub.s32 2048, 2048
          %578 = vsyncadd %s563, %s577
          %s579 = smul.addr %s575, 128
          %s580 = scalar_lea.hbm %s3, %s579
          %s581 = sshll.u32 %s566, 4
          %s582 = int_to_ptr.vmem [resolvable:$true] %s581
          %587 = dma.vmem_to_hbm [thread:$0]  %s582, 2048, %s580, %s563, 128, 128, 8
        $region44: #{tpu_custom_call.1} parent=31 // pred_fallthru
          _
        // Predicated region
        $region45: #{tpu_custom_call.1} parent=31 // pred_check
          %p588 = pneg %p138
        $region46: #{tpu_custom_call.1} parent=31 // pred_check_branch
          %590 = sbr.rel (%p588) target = $region48
        $region47: #{tpu_custom_call.1} parent=31 // pred_region
          %s591 = smul.u32 16, %s26
          %s593 = ssub.s32 1024, 1024
          %594 = vsyncadd %s568, %s593
          %s595 = smul.addr %s591, 64
          %s596 = scalar_lea.hbm %s4, %s595
          %s597 = sshll.u32 %s571, 4
          %s598 = int_to_ptr.vmem [resolvable:$true] %s597
          %603 = dma.vmem_to_hbm [thread:$0]  %s598, 1024, %s596, %s568, 64, 64, 4
        $region48: #{tpu_custom_call.1} parent=31 // pred_fallthru
          _
      $region32: #{tpu_custom_call.1} parent=5 // pred_fallthru
        _
      %p604 = scmp.le.s32.totalorder 2, %s21
      // Predicated region
      $region49: #{tpu_custom_call.1} parent=5 // pred_check
        %p605 = pneg %p604
      $region50: #{tpu_custom_call.1} parent=5 // pred_check_branch
        %607 = sbr.rel (%p605) target = $region52
      $region51: #{tpu_custom_call.1} parent=5 // pred_region
        %s608 = ssub.s32 %s21, 2
        // Predicated region
        $region53: #{tpu_custom_call.1} parent=51 // pred_check
          %p609 = pneg %p118
        $region54: #{tpu_custom_call.1} parent=51 // pred_check_branch
          %611 = sbr.rel (%p609) target = $region56
        $region55: #{tpu_custom_call.1} parent=51 // pred_region
          %s612 = sand.u32 %s103, 1
          %s613 = scalar_lea.sflag [#allocation4], %s612
          %s614 = sand.u32 %s103, 1
          %s615 = smul.addr %s614, 128
          %s616 = scalar_lea.vmem [#allocation7], %s615
          %617 = dma.done %s613, 2048
        $region56: #{tpu_custom_call.1} parent=51 // pred_fallthru
          _
        // Predicated region
        $region57: #{tpu_custom_call.1} parent=51 // pred_check
          %p618 = pneg %p144
        $region58: #{tpu_custom_call.1} parent=51 // pred_check_branch
          %620 = sbr.rel (%p618) target = $region60
        $region59: #{tpu_custom_call.1} parent=51 // pred_region
          %s621 = sand.u32 %s129, 1
          %s622 = scalar_lea.sflag [#allocation9], %s621
          %s623 = sand.u32 %s129, 1
          %s624 = smul.addr %s623, 64
          %s625 = scalar_lea.vmem [#allocation8], %s624
          %626 = dma.done %s622, 1024
        $region60: #{tpu_custom_call.1} parent=51 // pred_fallthru
          _
      $region52: #{tpu_custom_call.1} parent=5 // pred_fallthru
        _
    $region6: #{tpu_custom_call.1} parent=1 // loop_footer
      %s25 = sadd.s32 1, %s21
    $region7: #{tpu_custom_call.1} parent=1 // loop_footer_branch
      %20 = sbr.rel target = $region3
    $region8: #{tpu_custom_call.1} parent=1 // loop_exit
      _
    %627 = vsyncpa [#allocation3], 1
    %s628 = scalar_lea.sflag [#allocation3], 1
    %629 = vsyncpa %s628, 1
    %630 = vsyncpa [#allocation6], 1
    %631 = vsyncpa [#allocation4], 1
    %s632 = scalar_lea.sflag [#allocation4], 1
    %633 = vsyncpa %s632, 1
    %634 = vsyncpa [#allocation9], 1
    %s635 = scalar_lea.sflag [#allocation9], 1
    %636 = vsyncpa %s635, 1

</llo_original>
